<compile_context>
chip_gen: v5e
topology: v5e:2x2
jax: 0.10.0
libtpu: 0.0.40
codegen_flags: <defaults>
</compile_context>

<pallas_src>
import jax
import jax.numpy as jnp
from jax.experimental import pallas as pl
from jax.experimental.pallas import tpu as pltpu


def _round_up(n, m):
    return ((n + m - 1) // m) * m


def _bilinear_btt_wq_kernel(w_ref, x_ref, o_ref):
    # w_ref: (hb_block, d_out, d_in)  pre-normalized weight tile; its index_map
    #        ignores the BT grid axis, so it stays VMEM-resident across the
    #        inner b sweep (no re-DMA while streaming x).
    # x_ref: (hb_block, d_in, bt_tile)
    # o_ref: (hb_block, d_out, bt_tile)
    #
    # NOTE: for f32 operands the (M=d_out, K=d_in) micro-matmuls are badly
    # shaped for the MXU; if a bundle dump shows the MXU slot binding (most
    # likely on v7x), cast both operands to bf16 here and keep
    # preferred_element_type=f32 -- skipped by default to preserve f32
    # accuracy vs. the reference.
    o_ref[...] = jnp.einsum(
        "hoc,hcb->hob",
        w_ref[...],
        x_ref[...],
        preferred_element_type=jnp.float32,
    ).astype(o_ref.dtype)


def _vmem_config():
    """Returns (tile_budget_bytes, vmem_limit_bytes, want_two_parallel_steps)."""
    kind = ""
    cap = None
    try:
        kind = jax.devices()[0].device_kind.lower()
    except Exception:
        pass
    try:
        cap = int(pltpu.get_tpu_info().vmem_capacity_bytes)
    except Exception:
        cap = None

    is_v7 = "7" in kind
    if (not is_v7) and cap is not None and cap >= 100 * 1024 * 1024:
        # v5e / v6e: 128 MiB VMEM, single TensorCore per chip -> big tiles,
        # no forced grid split for megacore.
        return 64 * 1024 * 1024, 96 * 1024 * 1024, False

    # v7x (64 MiB per TC, 2 TCs) or unknown hardware: conservative
    # double-buffer budget, keep >= 2 steps along a parallel axis.
    limit = 48 * 1024 * 1024
    if cap is not None:
        limit = min(limit, (cap * 3) // 4)
    budget = min(24 * 1024 * 1024, limit // 2)
    return budget, limit, True


def _choose_tiles(Hb, d_out, d_in, BT, w_itemsize, x_itemsize,
                  tile_budget, want_two_steps):
    """Returns (hb_block, bt_tile); neither needs to divide Hb / BT (cdiv grid)."""
    bt_full = _round_up(BT, 128)

    def step_bytes(hb, bt):
        # Double-buffered HBM<->VMEM tiles for W, x, out, plus one f32
        # accumulator slab for the einsum result (counted at 4 B regardless
        # of the I/O dtype).
        w_b = hb * d_out * d_in * w_itemsize
        x_b = hb * d_in * bt * x_itemsize
        o_b = hb * d_out * bt * x_itemsize
        acc_b = hb * d_out * bt * 4
        return 2 * (w_b + x_b + o_b) + acc_b

    # 1) Lane-dense BT baseline: >= 512 lanes when BT allows it
    #    (measured: 128-wide tiles ~29% of HBM roofline, 512-wide ~85%).
    bt_tile = min(bt_full, 512)

    # 2) Largest head block that fits the budget at the baseline BT tile.
    hb_block = max(1, Hb)
    while hb_block > 1 and step_bytes(hb_block, bt_tile) > tile_budget:
        hb_block = (hb_block + 1) // 2

    # 3) If still over budget (huge d_out*d_in), shrink the BT tile.
    while bt_tile > 128 and step_bytes(hb_block, bt_tile) > tile_budget:
        bt_tile = max(128, _round_up(bt_tile // 2, 128))

    # 4) Grow the BT tile with remaining headroom (fewer grid steps / longer DMAs).
    for cand in (2048, 1024, 768, 512):
        cand = min(cand, bt_full)
        if cand > bt_tile and step_bytes(hb_block, cand) <= tile_budget:
            bt_tile = cand
            break

    # 5) Megacore (v7x): keep >= 2 steps along one parallel axis.  Prefer a BT
    #    split only when the halves stay >= 512 lanes wide; otherwise split
    #    heads so lane density is preserved.
    if want_two_steps and hb_block >= Hb and bt_tile >= bt_full:
        if bt_tile >= 1024:
            bt_tile = _round_up(bt_tile // 2, 128)
        elif Hb >= 2:
            hb_block = (Hb + 1) // 2
        elif bt_tile >= 256:
            bt_tile = max(128, _round_up(bt_tile // 2, 128))
        # else: a single tiny block; nothing worth splitting.

    return hb_block, bt_tile


def bilinear_btt_wq_projection(weight, x):
    """weight: (Hb, d_out, d_in), x: (Hb, d_in, BT) -> (Hb, d_out, BT)."""
    Hb, d_out, d_in = weight.shape
    Hb_x, d_in_x, BT = x.shape
    assert Hb == Hb_x and d_in == d_in_x

    # --- glue: global scalar normalization (tiny reduction over W).  W is
    # fully read here anyway, so the scale is folded in once and the kernel
    # body is a pure batched matmul (no per-grid-step rescale).
    w32 = weight.astype(jnp.float32)
    rms = jnp.sqrt(jnp.mean(w32 * w32) + 1e-08)
    init_scale = (min(d_in, d_out) / (d_in * d_in)) ** 0.5
    denom = jnp.maximum(jnp.float32(1.0), rms / jnp.float32(init_scale))
    w_normed = (w32 / denom).astype(weight.dtype)

    tile_budget, vmem_limit, want_two = _vmem_config()
    hb_block, bt_tile = _choose_tiles(
        Hb, d_out, d_in, BT,
        jnp.dtype(weight.dtype).itemsize, jnp.dtype(x.dtype).itemsize,
        tile_budget, want_two)

    # No padding / slicing: cdiv grid, Pallas masks the ragged edge blocks.
    grid = (pl.cdiv(Hb, hb_block), pl.cdiv(BT, bt_tile))

    return pl.pallas_call(
        _bilinear_btt_wq_kernel,
        out_shape=jax.ShapeDtypeStruct((Hb, d_out, BT), x.dtype),
        grid_spec=pl.GridSpec(
            grid=grid,
            in_specs=[
                # W block index ignores the BT grid axis -> the W tile is not
                # re-DMA'd while sweeping BT.
                pl.BlockSpec((hb_block, d_out, d_in), lambda h, b: (h, 0, 0)),
                # If profiling shows exposed DMA, pipeline_mode=pl.Buffered(3)
                # on x/out is a cheap knob (re-check VMEM headroom on v7x).
                pl.BlockSpec((hb_block, d_in, bt_tile), lambda h, b: (h, 0, b)),
            ],
            out_specs=pl.BlockSpec(
                (hb_block, d_out, bt_tile), lambda h, b: (h, 0, b)),
        ),
        compiler_params=pltpu.CompilerParams(
            dimension_semantics=("parallel", "parallel"),
            vmem_limit_bytes=vmem_limit,
        ),
    )(w_normed, x)


def _reference(weight, x):
    rms = jnp.sqrt(jnp.mean(weight.astype(jnp.float32) ** 2.0) + 1e-08)
    d_in = weight.shape[-1]
    d_out = weight.shape[-2]
    init_scale = (min(d_in, d_out) / (d_in * d_in)) ** 0.5
    w_normed = weight / jnp.maximum(1.0, rms / init_scale)
    return jnp.einsum("hoc,hcb->hob", w_normed, x)


if __name__ == "__main__":
    key = jax.random.PRNGKey(0)
    k1, k2, k3, k4 = jax.random.split(key, 4)

    # Case 1: aligned shapes (lane-dense BT tiling; on v7x the BT axis is
    # split so megacore gets >= 2 parallel steps, on v5e/v6e it's one block).
    Hb, d_out, d_in, BT = 4, 16, 8, 1024
    w1 = jax.random.normal(k1, (Hb, d_out, d_in), dtype=jnp.float32)
    x1 = jax.random.normal(k2, (Hb, d_in, BT), dtype=jnp.float32)
    out1 = jax.block_until_ready(bilinear_btt_wq_projection(w1, x1))
    ref1 = jax.block_until_ready(_reference(w1, x1))
    assert out1.shape == (Hb, d_out, BT)
    assert jnp.allclose(out1, ref1, atol=2e-2, rtol=2e-2), \
        float(jnp.max(jnp.abs(out1 - ref1)))

    # Case 2: ragged shapes (exercises the cdiv / masked-edge-block path:
    # no pad or slice HBM round-trips).
    Hb, d_out, d_in, BT = 3, 16, 8, 200
    w2 = jax.random.normal(k3, (Hb, d_out, d_in), dtype=jnp.float32)
    x2 = jax.random.normal(k4, (Hb, d_in, BT), dtype=jnp.float32)
    out2 = jax.block_until_ready(bilinear_btt_wq_projection(w2, x2))
    ref2 = jax.block_until_ready(_reference(w2, x2))
    assert out2.shape == (Hb, d_out, BT)
    assert jnp.allclose(out2, ref2, atol=2e-2, rtol=2e-2), \
        float(jnp.max(jnp.abs(out2 - ref2)))

    print("KERNEL_OK")
</pallas_src>

<mosaic_0001>
module attributes {stable_mosaic.version = 11 : i64} {
  func.func @_bilinear_btt_wq_kernel(%arg0: i32, %arg1: i32, %arg2: memref<4x16x8xf32, #tpu.memory_space<vmem>>, %arg3: memref<4x8x512xf32, #tpu.memory_space<vmem>>, %arg4: memref<4x16x512xf32, #tpu.memory_space<vmem>>) attributes {dimension_semantics = [#tpu.dimension_semantics<parallel>, #tpu.dimension_semantics<parallel>], iteration_bounds = array<i64: 1, 2>, scalar_prefetch = 0 : i64, scratch_operands = 0 : i64, tpu.core_type = #tpu.core_type<tc>, window_params = [{transform_indices = @transform_0, window_bounds = array<i64: 4, 16, 8>}, {transform_indices = @transform_1, window_bounds = array<i64: 4, 8, 512>}, {transform_indices = @transform_2, window_bounds = array<i64: 4, 16, 512>}]} {
    %c0 = arith.constant 0 : index
    %c0_0 = arith.constant 0 : index
    %c0_1 = arith.constant 0 : index
    %0 = vector.load %arg2[%c0, %c0_0, %c0_1] : memref<4x16x8xf32, #tpu.memory_space<vmem>>, vector<4x16x8xf32>
    %c0_2 = arith.constant 0 : index
    %c0_3 = arith.constant 0 : index
    %c0_4 = arith.constant 0 : index
    %1 = vector.load %arg3[%c0_2, %c0_3, %c0_4] : memref<4x8x512xf32, #tpu.memory_space<vmem>>, vector<4x8x512xf32>
    "tpu.trace_start"() <{level = 10 : i32, message = "hoc,hcb->hob"}> : () -> ()
    %cst = arith.constant dense<0.000000e+00> : vector<4x16x512xf32>
    %2 = tpu.matmul %0, %1, %cst {dimension_numbers = #tpu.dot_dimension_numbers<[2], [1], [1], [2], [0, 0, 0, 1, 1, 2], [0], [0]>} : vector<4x16x8xf32>, vector<4x8x512xf32>, vector<4x16x512xf32> -> vector<4x16x512xf32>
    "tpu.trace_stop"() : () -> ()
    %c0_5 = arith.constant 0 : index
    %c0_6 = arith.constant 0 : index
    %c0_7 = arith.constant 0 : index
    %3 = vector.load %arg4[%c0_5, %c0_6, %c0_7] : memref<4x16x512xf32, #tpu.memory_space<vmem>>, vector<4x16x512xf32>
    tpu.vector_store %arg4[%c0_5, %c0_6, %c0_7], %2 {strides = array<i32>} : memref<4x16x512xf32, #tpu.memory_space<vmem>>, vector<4x16x512xf32>,
    return
  }
  func.func @transform_0(%arg0: i32, %arg1: i32) -> (i32, i32, i32) {
    %c0_i32 = arith.constant 0 : i32
    %c0_i32_0 = arith.constant 0 : i32
    %c0_i32_1 = arith.constant 0 : i32
    return %arg0, %c0_i32, %c0_i32_0 : i32, i32, i32
  }
  func.func @transform_1(%arg0: i32, %arg1: i32) -> (i32, i32, i32) {
    %c0_i32 = arith.constant 0 : i32
    %c0_i32_0 = arith.constant 0 : i32
    return %arg0, %c0_i32, %arg1 : i32, i32, i32
  }
  func.func @transform_2(%arg0: i32, %arg1: i32) -> (i32, i32, i32) {
    %c0_i32 = arith.constant 0 : i32
    %c0_i32_0 = arith.constant 0 : i32
    return %arg0, %c0_i32, %arg1 : i32, i32, i32
  }
}

</mosaic_0001>

<llo_original>
// kernel: tpu_custom_call.1
$region0: #{tpu_custom_call.1}
  #allocation0 [shape = 'u32[]', space=smem, size = 0x4, offset = 0x4, fixed_abs, tag = 'smem constant byte address 0x4 - core index']
  #allocation1 [shape = 'u32[72,128]{1,0:T(1,128)}', space=vmem, size = 0x9000, scoped, tag = 'internal scratch']
  %s0 = inlined_call_operand.vmem [shape: f32[4,16,8], index: 0, kind: input, shape index: {}]
  %s1 = inlined_call_operand.hbm [shape: f32[4,8,1024], index: 1, kind: input, shape index: {}]
  %s2 = inlined_call_operand.hbm [shape: f32[4,16,1024], index: 2, kind: output, shape index: {}]
  %s3 = sld [smem:[#allocation0]]
  $region45: #{tpu_custom_call.1} parent=0
    _
  %s5 = ssub.s32 1, %s3
  %s6 = scalar_select 0, %s5, %s3
  $region1: #{tpu_custom_call.1} parent=0
    #allocation2 [shape = 'u8[131072]{0}', space=vmem, size = 0x20000, scoped, tag = 'input window, operand 1']
    #allocation3 [shape = 's32[2]{0}', space=sflag, size = 0x8, scoped, tag = 'scoped memory for tpu_custom_call.1']
    #allocation4 [shape = 's32[2]{0}', space=sflag, size = 0x8, scoped, tag = 'scoped memory for tpu_custom_call.1']
    #allocation5 [shape = 'u8[262144]{0}', space=vmem, size = 0x40000, scoped, tag = 'output window, operand 0']
    %7 = vsyncpa [#allocation3], 0
    %s8 = scalar_lea.sflag [#allocation3], 1
    %9 = vsyncpa %s8, 0
    %10 = vsyncpa [#allocation4], 0
    %s11 = scalar_lea.sflag [#allocation4], 1
    %12 = vsyncpa %s11, 0
    loop: start=0, step=1, limit=4
    $region2: #{tpu_custom_call.1} parent=1 // loop_pre_header
      _
    $region3: #{tpu_custom_call.1} parent=1 // loop_header
      %s14 = sphi 0, %s18
      %p15 = scmp.ge.s32.totalorder %s14, 4
      %s21 = sphi 0, %s33
      %s22 = sphi 0, %s29
      %s23 = sphi 0, %s21
      %s24 = sphi 0, %s22
      %s25 = sphi 0, %s23
      %s26 = sphi 0, %s24
      %s36 = sphi 0, %s38
      %s39 = sphi 0, %s36
      %s40 = sphi 0, %s39
      %s56 = sphi 0, %s40
      %s64 = sphi 0, %s66
      %s67 = sphi 0, %s64
      %s68 = sphi 0, %s67
      %s84 = sphi 0, %s68
      %s92 = sphi 0, %s94
      %s95 = sphi 0, %s92
      %s96 = sphi 0, %s95
      %s112 = sphi 0, %s96
    $region4: #{tpu_custom_call.1} parent=1 // loop_header_branch
      %17 = sbr.rel (%p15) target = $region8
    $region5: #{tpu_custom_call.1} parent=1 // loop_body
      %s19 = ssub.s32 %s14, 1
      %s20 = ssub.s32 %s14, 2
      %s27 = sadd.s32 1, %s22
      %p28 = scmp.ge.s32.totalorder %s27, 2
      %s29 = scalar_select %p28, 0, %s27
      %s30 = sadd.s32 1, %s21
      %s31 = scalar_select %p28, %s30, %s21
      %p32 = scmp.ge.s32.totalorder %s31, 1
      %s33 = scalar_select %p32, 0, %s31
      %s34 = ssub.s32 %s21, %s33
      %p35 = scmp.eq.s32.totalorder %s34, 0
      %s37 = sadd.s32 %s36, 1
      %s38 = scalar_select %p35, %s36, %s37
      %p41 = pneg %p35
      %p42 = scmp.eq.s32.totalorder %s14, 1
      %p43 = por %p41, %p42
      %p44 = scmp.ne.s32.totalorder %s36, %s39
      %p45 = scmp.eq.s32.totalorder %s14, 0
      %p46 = por %p44, %p45
      %p47 = scmp.ne.s32.totalorder %s36, %s39
      %p48 = scmp.eq.s32.totalorder %s19, 1
      %p49 = por %p47, %p48
      %p50 = scmp.ne.s32.totalorder %s39, %s40
      %p51 = scmp.eq.s32.totalorder %s19, 0
      %p52 = por %p50, %p51
      %p53 = scmp.ne.s32.totalorder %s39, %s40
      %p54 = scmp.eq.s32.totalorder %s20, 1
      %p55 = por %p53, %p54
      %p57 = scmp.ne.s32.totalorder %s40, %s56
      %p58 = scmp.eq.s32.totalorder %s20, 0
      %p59 = por %p57, %p58
      %s60 = ssub.s32 %s21, %s33
      %s61 = ssub.s32 %s22, %s29
      %s62 = sor.u32 %s60, %s61
      %p63 = scmp.eq.s32.totalorder %s62, 0
      %s65 = sadd.s32 %s64, 1
      %s66 = scalar_select %p63, %s64, %s65
      %p69 = pneg %p63
      %p70 = scmp.eq.s32.totalorder %s14, 1
      %p71 = por %p69, %p70
      %p72 = scmp.ne.s32.totalorder %s64, %s67
      %p73 = scmp.eq.s32.totalorder %s14, 0
      %p74 = por %p72, %p73
      %p75 = scmp.ne.s32.totalorder %s64, %s67
      %p76 = scmp.eq.s32.totalorder %s19, 1
      %p77 = por %p75, %p76
      %p78 = scmp.ne.s32.totalorder %s67, %s68
      %p79 = scmp.eq.s32.totalorder %s19, 0
      %p80 = por %p78, %p79
      %p81 = scmp.ne.s32.totalorder %s67, %s68
      %p82 = scmp.eq.s32.totalorder %s20, 1
      %p83 = por %p81, %p82
      %p85 = scmp.ne.s32.totalorder %s68, %s84
      %p86 = scmp.eq.s32.totalorder %s20, 0
      %p87 = por %p85, %p86
      %s88 = ssub.s32 %s21, %s33
      %s89 = ssub.s32 %s22, %s29
      %s90 = sor.u32 %s88, %s89
      %p91 = scmp.eq.s32.totalorder %s90, 0
      %s93 = sadd.s32 %s92, 1
      %s94 = scalar_select %p91, %s92, %s93
      %p97 = pneg %p91
      %p98 = scmp.eq.s32.totalorder %s14, 1
      %p99 = por %p97, %p98
      %p100 = scmp.ne.s32.totalorder %s92, %s95
      %p101 = scmp.eq.s32.totalorder %s14, 0
      %p102 = por %p100, %p101
      %p103 = scmp.ne.s32.totalorder %s92, %s95
      %p104 = scmp.eq.s32.totalorder %s19, 1
      %p105 = por %p103, %p104
      %p106 = scmp.ne.s32.totalorder %s95, %s96
      %p107 = scmp.eq.s32.totalorder %s19, 0
      %p108 = por %p106, %p107
      %p109 = scmp.ne.s32.totalorder %s95, %s96
      %p110 = scmp.eq.s32.totalorder %s20, 1
      %p111 = por %p109, %p110
      %p113 = scmp.ne.s32.totalorder %s96, %s112
      %p114 = scmp.eq.s32.totalorder %s20, 0
      %p115 = por %p113, %p114
      %p116 = scmp.le.s32.totalorder 1, %s14
      %p117 = scmp.lt.s32.totalorder %s14, 3
      %p118 = pnand %p116, %p117
      %p119 = pneg %p118
      // Predicated region
      $region9: #{tpu_custom_call.1} parent=5 // pred_check
        _
      $region10: #{tpu_custom_call.1} parent=5 // pred_check_branch
        %121 = sbr.rel (%p118) target = $region12
      $region11: #{tpu_custom_call.1} parent=5 // pred_region
        %s122 = ssub.s32 %s14, 1
        // Predicated region
        $region13: #{tpu_custom_call.1} parent=11 // pred_check
          %p123 = pneg %p52
        $region14: #{tpu_custom_call.1} parent=11 // pred_check_branch
          %125 = sbr.rel (%p123) target = $region16
        $region15: #{tpu_custom_call.1} parent=11 // pred_region
          %s126 = smul.u32 4, %s23
          %p127 = scmp.lt.s32.totalorder %s126, 3
          %s128 = scalar_select %p127, %s126, 3
          %s129 = smul.addr %s128, 2
          %s130 = smul.addr %s129, 8
          %s131 = scalar_lea.vmem %s0, %s130
          %s132 = smul.u32 4, %s23
        $region16: #{tpu_custom_call.1} parent=11 // pred_fallthru
          _
      $region12: #{tpu_custom_call.1} parent=5 // pred_fallthru
        _
      %p133 = scmp.lt.s32.totalorder %s14, 2
      // Predicated region
      $region17: #{tpu_custom_call.1} parent=5 // pred_check
        %p134 = pneg %p133
      $region18: #{tpu_custom_call.1} parent=5 // pred_check_branch
        %136 = sbr.rel (%p134) target = $region20
      $region19: #{tpu_custom_call.1} parent=5 // pred_region
        // Predicated region
        $region21: #{tpu_custom_call.1} parent=19 // pred_check
          %p137 = pneg %p74
        $region22: #{tpu_custom_call.1} parent=19 // pred_check_branch
          %139 = sbr.rel (%p137) target = $region24
        $region23: #{tpu_custom_call.1} parent=19 // pred_region
          %s140 = sand.u32 %s64, 1
          %s141 = scalar_lea.sflag [#allocation3], %s140
          %s142 = sand.u32 %s64, 1
          %s143 = smul.addr %s142, 128
          %s144 = scalar_lea.vmem [#allocation2], %s143
          %s145 = smul.u32 4, %s21
          %s146 = smul.u32 4, %s22
          %148 = vsyncadd %s141, 0
          %s149 = smul.addr %s145, 8
          %s150 = sadd.s32 %s146, %s149
          %s151 = smul.addr %s150, 8
          %s152 = scalar_lea.hbm %s1, %s151
          %s153 = sshll.u32 %s152, 4
          %s154 = int_to_ptr.hbm [resolvable:$true] %s153
          %s155 = sshll.u32 %s144, 4
          %s156 = int_to_ptr.vmem [resolvable:$true] %s155
          %161 = dma.hbm_to_vmem [thread:$0]  %s154, 2048, %s156, %s141, 1024, 512, 32
        $region24: #{tpu_custom_call.1} parent=19 // pred_fallthru
          _
      $region20: #{tpu_custom_call.1} parent=5 // pred_fallthru
        _
      %p162 = scmp.le.s32.totalorder 1, %s14
      %p163 = scmp.lt.s32.totalorder %s14, 3
      %p164 = pnand %p162, %p163
      %p165 = pneg %p164
      // Predicated region
      $region25: #{tpu_custom_call.1} parent=5 // pred_check
        _
      $region26: #{tpu_custom_call.1} parent=5 // pred_check_branch
        %167 = sbr.rel (%p164) target = $region28
      $region27: #{tpu_custom_call.1} parent=5 // pred_region
        %s168 = ssub.s32 %s14, 1
        %s169 = sand.u32 %s67, 1
        %s170 = scalar_lea.sflag [#allocation3], %s169
        %s171 = sand.u32 %s67, 1
        %s172 = smul.addr %s171, 128
        %s173 = scalar_lea.vmem [#allocation2], %s172
        // Predicated region
        $region29: #{tpu_custom_call.1} parent=27 // pred_check
          %p174 = pneg %p80
        $region30: #{tpu_custom_call.1} parent=27 // pred_check_branch
          %176 = sbr.rel (%p174) target = $region32
        $region31: #{tpu_custom_call.1} parent=27 // pred_region
          %178 = dma.done %s170, 2048
        $region32: #{tpu_custom_call.1} parent=27 // pred_fallthru
          _
        %s179 = smul.u32 4, %s23
        %p180 = scmp.lt.s32.totalorder %s179, 3
        %s181 = scalar_select %p180, %s179, 3
        %s182 = smul.addr %s181, 2
        %s183 = smul.addr %s182, 8
        %s184 = scalar_lea.vmem %s0, %s183
        %p185 = pneg %p52
        %p186 = pneg %p49
        %s187 = sand.u32 %s67, 1
        %s188 = scalar_lea.sflag [#allocation3], %s187
        %s189 = sand.u32 %s67, 1
        %s190 = smul.addr %s189, 128
        %s191 = scalar_lea.vmem [#allocation2], %s190
        %p192 = pneg %p80
        %p193 = pneg %p77
        %p194 = pneg %p108
        %p195 = pneg %p105
        %s196 = sand.u32 %s95, 1
        %s197 = scalar_lea.sflag [#allocation4], %s196
        %s198 = sand.u32 %s95, 1
        %s199 = smul.addr %s198, 256
        %s200 = scalar_lea.vmem [#allocation5], %s199
        %s201 = smul.u32 4, %s23
        %p202 = scmp.lt.s32.totalorder %s201, 3
        %s203 = scalar_select %p202, %s201, 3
        %s204 = smul.addr %s203, 2
        %s205 = smul.addr %s204, 8
        %s206 = scalar_lea.vmem %s0, %s205
        %s207 = smul.u32 4, %s23
        %s208 = smul.u32 4, %s23
        %s209 = smul.u32 4, %s24
        %s210 = smul.u32 4, %s23
        %s211 = smul.u32 4, %s24
        %v212 = vld [vmem:[%s206] sm:$0xff]
        %v213 = vld [vmem:[%s206 + $0x8] sm:$0xff]
        %v214 = vld [vmem:[%s206 + $0x10] sm:$0xff]
        %v215 = vld [vmem:[%s206 + $0x18] sm:$0xff]
        %v216 = vld [vmem:[%s206 + $0x20] sm:$0xff]
        %v217 = vld [vmem:[%s206 + $0x28] sm:$0xff]
        %v218 = vld [vmem:[%s206 + $0x30] sm:$0xff]
        %v219 = vld [vmem:[%s206 + $0x38] sm:$0xff]
        %v220 = vld [vmem:[%s173] sm:$0xff]
        %v221 = vld [vmem:[%s173 + $0x8] sm:$0xff]
        %v222 = vld [vmem:[%s173 + $0x10] sm:$0xff]
        %v223 = vld [vmem:[%s173 + $0x18] sm:$0xff]
        %v224 = vld [vmem:[%s173 + $0x20] sm:$0xff]
        %v225 = vld [vmem:[%s173 + $0x28] sm:$0xff]
        %v226 = vld [vmem:[%s173 + $0x30] sm:$0xff]
        %v227 = vld [vmem:[%s173 + $0x38] sm:$0xff]
        %v228 = vld [vmem:[%s173 + $0x40] sm:$0xff]
        %v229 = vld [vmem:[%s173 + $0x48] sm:$0xff]
        %v230 = vld [vmem:[%s173 + $0x50] sm:$0xff]
        %v231 = vld [vmem:[%s173 + $0x58] sm:$0xff]
        %v232 = vld [vmem:[%s173 + $0x60] sm:$0xff]
        %v233 = vld [vmem:[%s173 + $0x68] sm:$0xff]
        %v234 = vld [vmem:[%s173 + $0x70] sm:$0xff]
        %v235 = vld [vmem:[%s173 + $0x78] sm:$0xff]
        %vm236 = vcmask 64512
        %v238 = vsel %vm236, %v212, 0
        %v241 = vsel %vm236, %v213, 0
        %243 = vmatpush.msra.mxu0 0.0
        %244 = vmatpush.msra.mxu0 0.0
        %245 = vmatpush.msra.mxu0 0.0
        %246 = vmatpush.msra.mxu0 0.0
        %247 = vmatpush.msra.mxu0 0.0
        %248 = vmatpush.msra.mxu0 0.0
        %249 = vmatpush.msra.mxu0 0.0
        %250 = vmatpush.msra.mxu0 0.0
        %251 = vmatpush.msra.mxu0 0.0
        %252 = vmatpush.msra.mxu0 0.0
        %253 = vmatpush.msra.mxu0 0.0
        %254 = vmatpush.msra.mxu0 0.0
        %255 = vmatpush.msra.mxu0 0.0
        %256 = vmatpush.msra.mxu0 0.0
        %257 = vmatpush.msra.mxu0 0.0
        %258 = vmatpush.msra.mxu0 %v220
        %259 = vmatmul.f32.gmra.mxu0 %v238
        %v260 = vpop.f32.mrf.mxu0
        %v261 = vadd.f32 0.0, %v260
        %262 = vmatmul.f32.gmra.mxu0 %v241
        %v263 = vpop.f32.mrf.mxu0
        %v264 = vadd.f32 0.0, %v263
        %265 = vdwg.mxu0
        %266 = vmatpush.msra.mxu0 0.0
        %267 = vmatpush.msra.mxu0 0.0
        %268 = vmatpush.msra.mxu0 0.0
        %269 = vmatpush.msra.mxu0 0.0
        %270 = vmatpush.msra.mxu0 0.0
        %271 = vmatpush.msra.mxu0 0.0
        %272 = vmatpush.msra.mxu0 0.0
        %273 = vmatpush.msra.mxu0 0.0
        %274 = vmatpush.msra.mxu0 0.0
        %275 = vmatpush.msra.mxu0 0.0
        %276 = vmatpush.msra.mxu0 0.0
        %277 = vmatpush.msra.mxu0 0.0
        %278 = vmatpush.msra.mxu0 0.0
        %279 = vmatpush.msra.mxu0 0.0
        %280 = vmatpush.msra.mxu0 0.0
        %281 = vmatpush.msra.mxu0 %v221
        %282 = vmatmul.f32.gmra.mxu0 %v238
        %v283 = vpop.f32.mrf.mxu0
        %v284 = vadd.f32 0.0, %v283
        %285 = vmatmul.f32.gmra.mxu0 %v241
        %v286 = vpop.f32.mrf.mxu0
        %v287 = vadd.f32 0.0, %v286
        %288 = vdwg.mxu0
        %289 = vmatpush.msra.mxu0 0.0
        %290 = vmatpush.msra.mxu0 0.0
        %291 = vmatpush.msra.mxu0 0.0
        %292 = vmatpush.msra.mxu0 0.0
        %293 = vmatpush.msra.mxu0 0.0
        %294 = vmatpush.msra.mxu0 0.0
        %295 = vmatpush.msra.mxu0 0.0
        %296 = vmatpush.msra.mxu0 0.0
        %297 = vmatpush.msra.mxu0 0.0
        %298 = vmatpush.msra.mxu0 0.0
        %299 = vmatpush.msra.mxu0 0.0
        %300 = vmatpush.msra.mxu0 0.0
        %301 = vmatpush.msra.mxu0 0.0
        %302 = vmatpush.msra.mxu0 0.0
        %303 = vmatpush.msra.mxu0 0.0
        %304 = vmatpush.msra.mxu0 %v222
        %305 = vmatmul.f32.gmra.mxu0 %v238
        %v306 = vpop.f32.mrf.mxu0
        %v307 = vadd.f32 0.0, %v306
        %308 = vmatmul.f32.gmra.mxu0 %v241
        %v309 = vpop.f32.mrf.mxu0
        %v310 = vadd.f32 0.0, %v309
        %311 = vdwg.mxu0
        %312 = vmatpush.msra.mxu0 0.0
        %313 = vmatpush.msra.mxu0 0.0
        %314 = vmatpush.msra.mxu0 0.0
        %315 = vmatpush.msra.mxu0 0.0
        %316 = vmatpush.msra.mxu0 0.0
        %317 = vmatpush.msra.mxu0 0.0
        %318 = vmatpush.msra.mxu0 0.0
        %319 = vmatpush.msra.mxu0 0.0
        %320 = vmatpush.msra.mxu0 0.0
        %321 = vmatpush.msra.mxu0 0.0
        %322 = vmatpush.msra.mxu0 0.0
        %323 = vmatpush.msra.mxu0 0.0
        %324 = vmatpush.msra.mxu0 0.0
        %325 = vmatpush.msra.mxu0 0.0
        %326 = vmatpush.msra.mxu0 0.0
        %327 = vmatpush.msra.mxu0 %v223
        %328 = vmatmul.f32.gmra.mxu0 %v238
        %v329 = vpop.f32.mrf.mxu0
        %v330 = vadd.f32 0.0, %v329
        %331 = vmatmul.f32.gmra.mxu0 %v241
        %v332 = vpop.f32.mrf.mxu0
        %v333 = vadd.f32 0.0, %v332
        %334 = vdwg.mxu0
        %v336 = vsel %vm236, %v214, 0
        %v339 = vsel %vm236, %v215, 0
        %341 = vmatpush.msra.mxu0 0.0
        %342 = vmatpush.msra.mxu0 0.0
        %343 = vmatpush.msra.mxu0 0.0
        %344 = vmatpush.msra.mxu0 0.0
        %345 = vmatpush.msra.mxu0 0.0
        %346 = vmatpush.msra.mxu0 0.0
        %347 = vmatpush.msra.mxu0 0.0
        %348 = vmatpush.msra.mxu0 0.0
        %349 = vmatpush.msra.mxu0 0.0
        %350 = vmatpush.msra.mxu0 0.0
        %351 = vmatpush.msra.mxu0 0.0
        %352 = vmatpush.msra.mxu0 0.0
        %353 = vmatpush.msra.mxu0 0.0
        %354 = vmatpush.msra.mxu0 0.0
        %355 = vmatpush.msra.mxu0 0.0
        %356 = vmatpush.msra.mxu0 %v224
        %357 = vmatmul.f32.gmra.mxu0 %v336
        %v358 = vpop.f32.mrf.mxu0
        %v359 = vadd.f32 0.0, %v358
        %360 = vmatmul.f32.gmra.mxu0 %v339
        %v361 = vpop.f32.mrf.mxu0
        %v362 = vadd.f32 0.0, %v361
        %363 = vdwg.mxu0
        %364 = vmatpush.msra.mxu0 0.0
        %365 = vmatpush.msra.mxu0 0.0
        %366 = vmatpush.msra.mxu0 0.0
        %367 = vmatpush.msra.mxu0 0.0
        %368 = vmatpush.msra.mxu0 0.0
        %369 = vmatpush.msra.mxu0 0.0
        %370 = vmatpush.msra.mxu0 0.0
        %371 = vmatpush.msra.mxu0 0.0
        %372 = vmatpush.msra.mxu0 0.0
        %373 = vmatpush.msra.mxu0 0.0
        %374 = vmatpush.msra.mxu0 0.0
        %375 = vmatpush.msra.mxu0 0.0
        %376 = vmatpush.msra.mxu0 0.0
        %377 = vmatpush.msra.mxu0 0.0
        %378 = vmatpush.msra.mxu0 0.0
        %379 = vmatpush.msra.mxu0 %v225
        %380 = vmatmul.f32.gmra.mxu0 %v336
        %v381 = vpop.f32.mrf.mxu0
        %v382 = vadd.f32 0.0, %v381
        %383 = vmatmul.f32.gmra.mxu0 %v339
        %v384 = vpop.f32.mrf.mxu0
        %v385 = vadd.f32 0.0, %v384
        %386 = vdwg.mxu0
        %387 = vmatpush.msra.mxu0 0.0
        %388 = vmatpush.msra.mxu0 0.0
        %389 = vmatpush.msra.mxu0 0.0
        %390 = vmatpush.msra.mxu0 0.0
        %391 = vmatpush.msra.mxu0 0.0
        %392 = vmatpush.msra.mxu0 0.0
        %393 = vmatpush.msra.mxu0 0.0
        %394 = vmatpush.msra.mxu0 0.0
        %395 = vmatpush.msra.mxu0 0.0
        %396 = vmatpush.msra.mxu0 0.0
        %397 = vmatpush.msra.mxu0 0.0
        %398 = vmatpush.msra.mxu0 0.0
        %399 = vmatpush.msra.mxu0 0.0
        %400 = vmatpush.msra.mxu0 0.0
        %401 = vmatpush.msra.mxu0 0.0
        %402 = vmatpush.msra.mxu0 %v226
        %403 = vmatmul.f32.gmra.mxu0 %v336
        %v404 = vpop.f32.mrf.mxu0
        %v405 = vadd.f32 0.0, %v404
        %406 = vmatmul.f32.gmra.mxu0 %v339
        %v407 = vpop.f32.mrf.mxu0
        %v408 = vadd.f32 0.0, %v407
        %409 = vdwg.mxu0
        %410 = vmatpush.msra.mxu0 0.0
        %411 = vmatpush.msra.mxu0 0.0
        %412 = vmatpush.msra.mxu0 0.0
        %413 = vmatpush.msra.mxu0 0.0
        %414 = vmatpush.msra.mxu0 0.0
        %415 = vmatpush.msra.mxu0 0.0
        %416 = vmatpush.msra.mxu0 0.0
        %417 = vmatpush.msra.mxu0 0.0
        %418 = vmatpush.msra.mxu0 0.0
        %419 = vmatpush.msra.mxu0 0.0
        %420 = vmatpush.msra.mxu0 0.0
        %421 = vmatpush.msra.mxu0 0.0
        %422 = vmatpush.msra.mxu0 0.0
        %423 = vmatpush.msra.mxu0 0.0
        %424 = vmatpush.msra.mxu0 0.0
        %425 = vmatpush.msra.mxu0 %v227
        %426 = vmatmul.f32.gmra.mxu0 %v336
        %v427 = vpop.f32.mrf.mxu0
        %v428 = vadd.f32 0.0, %v427
        %429 = vmatmul.f32.gmra.mxu0 %v339
        %v430 = vpop.f32.mrf.mxu0
        %v431 = vadd.f32 0.0, %v430
        %432 = vdwg.mxu0
        %v434 = vsel %vm236, %v216, 0
        %v437 = vsel %vm236, %v217, 0
        %439 = vmatpush.msra.mxu0 0.0
        %440 = vmatpush.msra.mxu0 0.0
        %441 = vmatpush.msra.mxu0 0.0
        %442 = vmatpush.msra.mxu0 0.0
        %443 = vmatpush.msra.mxu0 0.0
        %444 = vmatpush.msra.mxu0 0.0
        %445 = vmatpush.msra.mxu0 0.0
        %446 = vmatpush.msra.mxu0 0.0
        %447 = vmatpush.msra.mxu0 0.0
        %448 = vmatpush.msra.mxu0 0.0
        %449 = vmatpush.msra.mxu0 0.0
        %450 = vmatpush.msra.mxu0 0.0
        %451 = vmatpush.msra.mxu0 0.0
        %452 = vmatpush.msra.mxu0 0.0
        %453 = vmatpush.msra.mxu0 0.0
        %454 = vmatpush.msra.mxu0 %v228
        %455 = vmatmul.f32.gmra.mxu0 %v434
        %v456 = vpop.f32.mrf.mxu0
        %v457 = vadd.f32 0.0, %v456
        %458 = vmatmul.f32.gmra.mxu0 %v437
        %v459 = vpop.f32.mrf.mxu0
        %v460 = vadd.f32 0.0, %v459
        %461 = vdwg.mxu0
        %462 = vmatpush.msra.mxu0 0.0
        %463 = vmatpush.msra.mxu0 0.0
        %464 = vmatpush.msra.mxu0 0.0
        %465 = vmatpush.msra.mxu0 0.0
        %466 = vmatpush.msra.mxu0 0.0
        %467 = vmatpush.msra.mxu0 0.0
        %468 = vmatpush.msra.mxu0 0.0
        %469 = vmatpush.msra.mxu0 0.0
        %470 = vmatpush.msra.mxu0 0.0
        %471 = vmatpush.msra.mxu0 0.0
        %472 = vmatpush.msra.mxu0 0.0
        %473 = vmatpush.msra.mxu0 0.0
        %474 = vmatpush.msra.mxu0 0.0
        %475 = vmatpush.msra.mxu0 0.0
        %476 = vmatpush.msra.mxu0 0.0
        %477 = vmatpush.msra.mxu0 %v229
        %478 = vmatmul.f32.gmra.mxu0 %v434
        %v479 = vpop.f32.mrf.mxu0
        %v480 = vadd.f32 0.0, %v479
        %481 = vmatmul.f32.gmra.mxu0 %v437
        %v482 = vpop.f32.mrf.mxu0
        %v483 = vadd.f32 0.0, %v482
        %484 = vdwg.mxu0
        %485 = vmatpush.msra.mxu0 0.0
        %486 = vmatpush.msra.mxu0 0.0
        %487 = vmatpush.msra.mxu0 0.0
        %488 = vmatpush.msra.mxu0 0.0
        %489 = vmatpush.msra.mxu0 0.0
        %490 = vmatpush.msra.mxu0 0.0
        %491 = vmatpush.msra.mxu0 0.0
        %492 = vmatpush.msra.mxu0 0.0
        %493 = vmatpush.msra.mxu0 0.0
        %494 = vmatpush.msra.mxu0 0.0
        %495 = vmatpush.msra.mxu0 0.0
        %496 = vmatpush.msra.mxu0 0.0
        %497 = vmatpush.msra.mxu0 0.0
        %498 = vmatpush.msra.mxu0 0.0
        %499 = vmatpush.msra.mxu0 0.0
        %500 = vmatpush.msra.mxu0 %v230
        %501 = vmatmul.f32.gmra.mxu0 %v434
        %v502 = vpop.f32.mrf.mxu0
        %v503 = vadd.f32 0.0, %v502
        %504 = vmatmul.f32.gmra.mxu0 %v437
        %v505 = vpop.f32.mrf.mxu0
        %v506 = vadd.f32 0.0, %v505
        %507 = vdwg.mxu0
        %508 = vmatpush.msra.mxu0 0.0
        %509 = vmatpush.msra.mxu0 0.0
        %510 = vmatpush.msra.mxu0 0.0
        %511 = vmatpush.msra.mxu0 0.0
        %512 = vmatpush.msra.mxu0 0.0
        %513 = vmatpush.msra.mxu0 0.0
        %514 = vmatpush.msra.mxu0 0.0
        %515 = vmatpush.msra.mxu0 0.0
        %516 = vmatpush.msra.mxu0 0.0
        %517 = vmatpush.msra.mxu0 0.0
        %518 = vmatpush.msra.mxu0 0.0
        %519 = vmatpush.msra.mxu0 0.0
        %520 = vmatpush.msra.mxu0 0.0
        %521 = vmatpush.msra.mxu0 0.0
        %522 = vmatpush.msra.mxu0 0.0
        %523 = vmatpush.msra.mxu0 %v231
        %524 = vmatmul.f32.gmra.mxu0 %v434
        %v525 = vpop.f32.mrf.mxu0
        %v526 = vadd.f32 0.0, %v525
        %527 = vmatmul.f32.gmra.mxu0 %v437
        %v528 = vpop.f32.mrf.mxu0
        %v529 = vadd.f32 0.0, %v528
        %530 = vdwg.mxu0
        %v532 = vsel %vm236, %v218, 0
        %v535 = vsel %vm236, %v219, 0
        %537 = vmatpush.msra.mxu0 0.0
        %538 = vmatpush.msra.mxu0 0.0
        %539 = vmatpush.msra.mxu0 0.0
        %540 = vmatpush.msra.mxu0 0.0
        %541 = vmatpush.msra.mxu0 0.0
        %542 = vmatpush.msra.mxu0 0.0
        %543 = vmatpush.msra.mxu0 0.0
        %544 = vmatpush.msra.mxu0 0.0
        %545 = vmatpush.msra.mxu0 0.0
        %546 = vmatpush.msra.mxu0 0.0
        %547 = vmatpush.msra.mxu0 0.0
        %548 = vmatpush.msra.mxu0 0.0
        %549 = vmatpush.msra.mxu0 0.0
        %550 = vmatpush.msra.mxu0 0.0
        %551 = vmatpush.msra.mxu0 0.0
        %552 = vmatpush.msra.mxu0 %v232
        %553 = vmatmul.f32.gmra.mxu0 %v532
        %v554 = vpop.f32.mrf.mxu0
        %v555 = vadd.f32 0.0, %v554
        %556 = vmatmul.f32.gmra.mxu0 %v535
        %v557 = vpop.f32.mrf.mxu0
        %v558 = vadd.f32 0.0, %v557
        %559 = vdwg.mxu0
        %560 = vmatpush.msra.mxu0 0.0
        %561 = vmatpush.msra.mxu0 0.0
        %562 = vmatpush.msra.mxu0 0.0
        %563 = vmatpush.msra.mxu0 0.0
        %564 = vmatpush.msra.mxu0 0.0
        %565 = vmatpush.msra.mxu0 0.0
        %566 = vmatpush.msra.mxu0 0.0
        %567 = vmatpush.msra.mxu0 0.0
        %568 = vmatpush.msra.mxu0 0.0
        %569 = vmatpush.msra.mxu0 0.0
        %570 = vmatpush.msra.mxu0 0.0
        %571 = vmatpush.msra.mxu0 0.0
        %572 = vmatpush.msra.mxu0 0.0
        %573 = vmatpush.msra.mxu0 0.0
        %574 = vmatpush.msra.mxu0 0.0
        %575 = vmatpush.msra.mxu0 %v233
        %576 = vmatmul.f32.gmra.mxu0 %v532
        %v577 = vpop.f32.mrf.mxu0
        %v578 = vadd.f32 0.0, %v577
        %579 = vmatmul.f32.gmra.mxu0 %v535
        %v580 = vpop.f32.mrf.mxu0
        %v581 = vadd.f32 0.0, %v580
        %582 = vdwg.mxu0
        %583 = vmatpush.msra.mxu0 0.0
        %584 = vmatpush.msra.mxu0 0.0
        %585 = vmatpush.msra.mxu0 0.0
        %586 = vmatpush.msra.mxu0 0.0
        %587 = vmatpush.msra.mxu0 0.0
        %588 = vmatpush.msra.mxu0 0.0
        %589 = vmatpush.msra.mxu0 0.0
        %590 = vmatpush.msra.mxu0 0.0
        %591 = vmatpush.msra.mxu0 0.0
        %592 = vmatpush.msra.mxu0 0.0
        %593 = vmatpush.msra.mxu0 0.0
        %594 = vmatpush.msra.mxu0 0.0
        %595 = vmatpush.msra.mxu0 0.0
        %596 = vmatpush.msra.mxu0 0.0
        %597 = vmatpush.msra.mxu0 0.0
        %598 = vmatpush.msra.mxu0 %v234
        %599 = vmatmul.f32.gmra.mxu0 %v532
        %v600 = vpop.f32.mrf.mxu0
        %v601 = vadd.f32 0.0, %v600
        %602 = vmatmul.f32.gmra.mxu0 %v535
        %v603 = vpop.f32.mrf.mxu0
        %v604 = vadd.f32 0.0, %v603
        %605 = vdwg.mxu0
        %606 = vmatpush.msra.mxu0 0.0
        %607 = vmatpush.msra.mxu0 0.0
        %608 = vmatpush.msra.mxu0 0.0
        %609 = vmatpush.msra.mxu0 0.0
        %610 = vmatpush.msra.mxu0 0.0
        %611 = vmatpush.msra.mxu0 0.0
        %612 = vmatpush.msra.mxu0 0.0
        %613 = vmatpush.msra.mxu0 0.0
        %614 = vmatpush.msra.mxu0 0.0
        %615 = vmatpush.msra.mxu0 0.0
        %616 = vmatpush.msra.mxu0 0.0
        %617 = vmatpush.msra.mxu0 0.0
        %618 = vmatpush.msra.mxu0 0.0
        %619 = vmatpush.msra.mxu0 0.0
        %620 = vmatpush.msra.mxu0 0.0
        %621 = vmatpush.msra.mxu0 %v235
        %622 = vmatmul.f32.gmra.mxu0 %v532
        %v623 = vpop.f32.mrf.mxu0
        %v624 = vadd.f32 0.0, %v623
        %625 = vmatmul.f32.gmra.mxu0 %v535
        %v626 = vpop.f32.mrf.mxu0
        %v627 = vadd.f32 0.0, %v626
        %628 = vdwg.mxu0
        %629 = vst [vmem:[%s200] sm:$0xff] %v261
        %630 = vst [vmem:[%s200 + $0x8] sm:$0xff] %v284
        %631 = vst [vmem:[%s200 + $0x10] sm:$0xff] %v307
        %632 = vst [vmem:[%s200 + $0x18] sm:$0xff] %v330
        %633 = vst [vmem:[%s200 + $0x20] sm:$0xff] %v264
        %634 = vst [vmem:[%s200 + $0x28] sm:$0xff] %v287
        %635 = vst [vmem:[%s200 + $0x30] sm:$0xff] %v310
        %636 = vst [vmem:[%s200 + $0x38] sm:$0xff] %v333
        %637 = vst [vmem:[%s200 + $0x40] sm:$0xff] %v359
        %638 = vst [vmem:[%s200 + $0x48] sm:$0xff] %v382
        %639 = vst [vmem:[%s200 + $0x50] sm:$0xff] %v405
        %640 = vst [vmem:[%s200 + $0x58] sm:$0xff] %v428
        %641 = vst [vmem:[%s200 + $0x60] sm:$0xff] %v362
        %642 = vst [vmem:[%s200 + $0x68] sm:$0xff] %v385
        %643 = vst [vmem:[%s200 + $0x70] sm:$0xff] %v408
        %644 = vst [vmem:[%s200 + $0x78] sm:$0xff] %v431
        %645 = vst [vmem:[%s200 + $0x80] sm:$0xff] %v457
        %646 = vst [vmem:[%s200 + $0x88] sm:$0xff] %v480
        %647 = vst [vmem:[%s200 + $0x90] sm:$0xff] %v503
        %648 = vst [vmem:[%s200 + $0x98] sm:$0xff] %v526
        %649 = vst [vmem:[%s200 + $0xa0] sm:$0xff] %v460
        %650 = vst [vmem:[%s200 + $0xa8] sm:$0xff] %v483
        %651 = vst [vmem:[%s200 + $0xb0] sm:$0xff] %v506
        %652 = vst [vmem:[%s200 + $0xb8] sm:$0xff] %v529
        %653 = vst [vmem:[%s200 + $0xc0] sm:$0xff] %v555
        %654 = vst [vmem:[%s200 + $0xc8] sm:$0xff] %v578
        %655 = vst [vmem:[%s200 + $0xd0] sm:$0xff] %v601
        %656 = vst [vmem:[%s200 + $0xd8] sm:$0xff] %v624
        %657 = vst [vmem:[%s200 + $0xe0] sm:$0xff] %v558
        %658 = vst [vmem:[%s200 + $0xe8] sm:$0xff] %v581
        %659 = vst [vmem:[%s200 + $0xf0] sm:$0xff] %v604
        %660 = vst [vmem:[%s200 + $0xf8] sm:$0xff] %v627
        %s661 = sand.u32 %s95, 1
        %s662 = scalar_lea.sflag [#allocation4], %s661
        %s663 = sand.u32 %s95, 1
        %s664 = smul.addr %s663, 256
        %s665 = scalar_lea.vmem [#allocation5], %s664
        // Predicated region
        $region33: #{tpu_custom_call.1} parent=27 // pred_check
          %p666 = pneg %p105
        $region34: #{tpu_custom_call.1} parent=27 // pred_check_branch
          %668 = sbr.rel (%p666) target = $region36
        $region35: #{tpu_custom_call.1} parent=27 // pred_region
          %s669 = smul.u32 4, %s23
          %s670 = smul.u32 4, %s24
          %672 = vsyncadd %s662, 0
          %s673 = smul.addr %s669, 16
          %s674 = sadd.s32 %s670, %s673
          %s675 = smul.addr %s674, 8
          %s676 = scalar_lea.hbm %s2, %s675
          %s677 = sshll.u32 %s665, 4
          %s678 = int_to_ptr.vmem [resolvable:$true] %s677
          %s679 = sshll.u32 %s676, 4
          %s680 = int_to_ptr.hbm [resolvable:$true] %s679
          %685 = dma.vmem_to_hbm [thread:$0]  %s678, 4096, %s680, %s662, 512, 1024, 32
        $region36: #{tpu_custom_call.1} parent=27 // pred_fallthru
          _
      $region28: #{tpu_custom_call.1} parent=5 // pred_fallthru
        _
      %p686 = scmp.le.s32.totalorder 2, %s14
      // Predicated region
      $region37: #{tpu_custom_call.1} parent=5 // pred_check
        %p687 = pneg %p686
      $region38: #{tpu_custom_call.1} parent=5 // pred_check_branch
        %689 = sbr.rel (%p687) target = $region40
      $region39: #{tpu_custom_call.1} parent=5 // pred_region
        %s690 = ssub.s32 %s14, 2
        // Predicated region
        $region41: #{tpu_custom_call.1} parent=39 // pred_check
          %p691 = pneg %p111
        $region42: #{tpu_custom_call.1} parent=39 // pred_check_branch
          %693 = sbr.rel (%p691) target = $region44
        $region43: #{tpu_custom_call.1} parent=39 // pred_region
          %s694 = sand.u32 %s96, 1
          %s695 = scalar_lea.sflag [#allocation4], %s694
          %s696 = sand.u32 %s96, 1
          %s697 = smul.addr %s696, 256
          %s698 = scalar_lea.vmem [#allocation5], %s697
          %700 = dma.done %s695, 4096
        $region44: #{tpu_custom_call.1} parent=39 // pred_fallthru
          _
      $region40: #{tpu_custom_call.1} parent=5 // pred_fallthru
        _
    $region6: #{tpu_custom_call.1} parent=1 // loop_footer
      %s18 = sadd.s32 1, %s14
    $region7: #{tpu_custom_call.1} parent=1 // loop_footer_branch
      %13 = sbr.rel target = $region3
    $region8: #{tpu_custom_call.1} parent=1 // loop_exit
      _
    %701 = vsyncpa [#allocation3], 1
    %s702 = scalar_lea.sflag [#allocation3], 1
    %703 = vsyncpa %s702, 1
    %704 = vsyncpa [#allocation4], 1
    %s705 = scalar_lea.sflag [#allocation4], 1
    %706 = vsyncpa %s705, 1

</llo_original>
